<compile_context>
chip_gen: v6e
topology: v6e:2x2x1
jax: 0.10.0
libtpu: 0.0.40
codegen_flags: <defaults>
</compile_context>

<pallas_src>
import functools
import math

import jax
import jax.numpy as jnp
from jax.experimental import pallas as pl
from jax.experimental.pallas import tpu as pltpu

# TODO(synk): `base_encoder` is an arbitrary injected backbone (ResNet) in the
# original module; it is replaced here by a synthetic flatten->Linear->ReLU
# encoder since a full ResNet has no compact single-kernel Pallas equivalent.


def _encode_project_kernel(x1_ref, x2_ref, wenc_ref, w1_ref, gamma_ref, beta_ref,
                           w2_ref, b2_ref, z_ref, *, batch):
    """Encoder + projector + F.normalize for both views; writes padded z."""
    f32 = jnp.float32
    bf16 = jnp.bfloat16

    def backbone(x_ref):
        h = jnp.dot(x_ref[...], wenc_ref[...], preferred_element_type=f32)
        h = jnp.maximum(h, 0.0)
        # projector first Linear (bias=False); bf16 operands, f32 accumulation
        return jnp.dot(h.astype(bf16), w1_ref[...], preferred_element_type=f32)

    p1 = backbone(x1_ref)                       # (B, in_dim) f32
    p2 = backbone(x2_ref)                       # (B, in_dim) f32

    # BatchNorm1d (training mode, biased variance) over the 2B concatenated
    # rows; single-pass stats: var = E[p^2] - mean^2.
    inv_n = 1.0 / float(2 * batch)
    s1 = jnp.sum(p1, axis=0, keepdims=True) + jnp.sum(p2, axis=0, keepdims=True)
    s2 = (jnp.sum(p1 * p1, axis=0, keepdims=True)
          + jnp.sum(p2 * p2, axis=0, keepdims=True))
    mean = s1 * inv_n
    var = s2 * inv_n - mean * mean
    inv_std = jax.lax.rsqrt(var + 1e-5)
    scale = gamma_ref[...] * inv_std
    shift = beta_ref[...] - mean * scale

    def head(p):
        q = jnp.maximum(p * scale + shift, 0.0)                       # BN + ReLU
        z = jnp.dot(q.astype(bf16), w2_ref[...], preferred_element_type=f32)
        z = z + b2_ref[...]
        # F.normalize(z, dim=1), eps=1e-12, as rsqrt-multiply (EUP slot).
        inv_norm = jax.lax.rsqrt(
            jnp.maximum(jnp.sum(z * z, axis=1, keepdims=True), 1e-24))
        return z * inv_norm

    z_ref[...] = jnp.zeros_like(z_ref)          # zero the padding rows
    z_ref[0:batch, :] = head(p1)
    z_ref[batch:2 * batch, :] = head(p2)


def _supcon_loss_kernel(z_ref, labr_ref, labc_ref, sidr_ref, sidc_ref, out_ref,
                        m_sc, l_sc, ssl_dot, ssl_cnt, sup_dot, sup_cnt,
                        *, inv_T, n_valid, tq, tk):
    """Flash-style SupCon loss over (row_tile, col_tile) grid, z resident."""
    c = pl.program_id(1)
    num_c = pl.num_programs(1)
    row0 = pl.multiple_of(pl.program_id(0) * tq, tq)
    col0 = pl.multiple_of(c * tk, tk)

    @pl.when(c == 0)
    def _init():
        m_sc[...] = jnp.full_like(m_sc, -1e30)
        l_sc[...] = jnp.zeros_like(l_sc)
        ssl_dot[...] = jnp.zeros_like(ssl_dot)
        ssl_cnt[...] = jnp.zeros_like(ssl_cnt)
        sup_dot[...] = jnp.zeros_like(sup_dot)
        sup_cnt[...] = jnp.zeros_like(sup_cnt)

    z_row = z_ref[pl.ds(row0, tq), :]                 # (tq, d) f32
    z_col = z_ref[pl.ds(col0, tk), :]                 # (tk, d) f32
    s = jax.lax.dot_general(z_row, z_col, (((1,), (1,)), ((), ())),
                            preferred_element_type=jnp.float32) * inv_T

    rid = row0 + jax.lax.broadcasted_iota(jnp.int32, (tq, tk), 0)
    cid = col0 + jax.lax.broadcasted_iota(jnp.int32, (tq, tk), 1)
    lab_r = labr_ref[pl.ds(row0, tq), :]              # (tq, 1) int32
    sid_r = sidr_ref[pl.ds(row0, tq), :]              # (tq, 1) int32
    lab_c = labc_ref[:, pl.ds(col0, tk)]              # (1, tk) int32
    sid_c = sidc_ref[:, pl.ds(col0, tk)]              # (1, tk) int32

    # Boolean predicates instead of materialized float masks.
    keep = (cid < n_valid) & (rid != cid)             # logits_mask (valid, off-diag)
    same_sid = sid_r == sid_c
    pos_ssl = keep & same_sid                                        # I
    pos_sup = keep & (lab_r == lab_c) & jnp.logical_not(same_sid)    # mask - I

    zero = jnp.float32(0.0)
    one = jnp.float32(1.0)

    # Online (flash-style) logsumexp over kept columns.
    tile_max = jnp.max(jnp.where(keep, s, -1e30), axis=1, keepdims=True)
    m_new = jnp.maximum(m_sc[...], tile_max)
    p = jnp.where(keep, jnp.exp(s - m_new), zero)
    l_sc[...] = (l_sc[...] * jnp.exp(m_sc[...] - m_new)
                 + jnp.sum(p, axis=1, keepdims=True))
    m_sc[...] = m_new

    ssl_dot[...] += jnp.sum(jnp.where(pos_ssl, s, zero), axis=1, keepdims=True)
    ssl_cnt[...] += jnp.sum(jnp.where(pos_ssl, one, zero), axis=1, keepdims=True)
    sup_dot[...] += jnp.sum(jnp.where(pos_sup, s, zero), axis=1, keepdims=True)
    sup_cnt[...] += jnp.sum(jnp.where(pos_sup, one, zero), axis=1, keepdims=True)

    @pl.when(c == num_c - 1)
    def _finalize():
        # -sum(pos * log_prob) / cnt  ==  (cnt * LSE - sum(pos * score)) / cnt
        lse = m_sc[...] + jnp.log(jnp.maximum(l_sc[...], 1e-30))
        ssl_den = jnp.where(ssl_cnt[...] < 1e-6, one, ssl_cnt[...])
        sup_den = jnp.where(sup_cnt[...] < 1e-6, one, sup_cnt[...])
        ssl_row = ((ssl_cnt[...] * lse - ssl_dot[...])
                   * pl.reciprocal(ssl_den, approx=True))
        sup_row = ((sup_cnt[...] * lse - sup_dot[...])
                   * pl.reciprocal(sup_den, approx=True))
        valid_row = (row0 + jax.lax.broadcasted_iota(jnp.int32, (tq, 1), 0)) < n_valid
        ssl_part = jnp.sum(jnp.where(valid_row, ssl_row, zero))
        sup_part = jnp.sum(jnp.where(valid_row, sup_row, zero))
        sub = jax.lax.broadcasted_iota(jnp.int32, (8, 128), 0)
        lane = jax.lax.broadcasted_iota(jnp.int32, (8, 128), 1)
        out_ref[0] = jnp.where((sub == 0) & (lane == 0), ssl_part,
                               jnp.where((sub == 0) & (lane == 1), sup_part, zero))


def supcon_forward(x1, x2, labels, params, *, T=0.1, alpha=0.5, tq=128, tk=128):
    """Returns (SSL_loss_mean, Sup_loss_mean, total_loss_mean) as f32 scalars."""
    B = int(labels.shape[0])
    N = 2 * B
    in_dim = params["w1"].shape[0]
    dim = params["w2"].shape[1]

    # bf16 operands for the MXU matmuls (f32 accumulation inside the kernels).
    x1f = x1.reshape(B, -1).astype(jnp.bfloat16)
    x2f = x2.reshape(B, -1).astype(jnp.bfloat16)
    feat = x1f.shape[1]
    wenc = params["w_enc"].astype(jnp.bfloat16)
    w1 = params["w1"].astype(jnp.bfloat16)
    w2 = params["w2"].astype(jnp.bfloat16)
    gamma = params["gamma"].reshape(1, in_dim).astype(jnp.float32)
    beta = params["beta"].reshape(1, in_dim).astype(jnp.float32)
    b2 = params["b2"].reshape(1, dim).astype(jnp.float32)

    # Pad the row count up to a multiple of the loss tiles (MXU / lane friendly).
    step = tq * tk // math.gcd(tq, tk)
    n_pad = max(step, ((N + step - 1) // step) * step)

    vmem = pl.BlockSpec(memory_space=pltpu.MemorySpace.VMEM)
    enc_cost = pl.CostEstimate(
        flops=2 * N * feat * in_dim + 2 * N * in_dim * in_dim + 2 * N * in_dim * dim,
        transcendentals=N + in_dim,
        bytes_accessed=(N * feat * 2 + feat * in_dim * 2 + in_dim * in_dim * 2
                        + in_dim * dim * 2 + n_pad * dim * 4),
    )
    z_pad = pl.pallas_call(
        functools.partial(_encode_project_kernel, batch=B),
        out_shape=jax.ShapeDtypeStruct((n_pad, dim), jnp.float32),
        in_specs=[vmem] * 8,
        out_specs=vmem,
        compiler_params=pltpu.CompilerParams(vmem_limit_bytes=48 * 1024 * 1024),
        cost_estimate=enc_cost,
    )(x1f, x2f, wenc, w1, gamma, beta, w2, b2)

    # Tiny metadata vectors: labels and original-sample index, padded with -1.
    lab = labels.astype(jnp.int32)
    lab_full = jnp.concatenate([lab, lab])
    sid_full = jnp.tile(jnp.arange(B, dtype=jnp.int32), 2)
    pad = n_pad - N
    lab_full = jnp.pad(lab_full, (0, pad), constant_values=-1)
    sid_full = jnp.pad(sid_full, (0, pad), constant_values=-1)
    lab_r = lab_full.reshape(n_pad, 1)
    lab_c = lab_full.reshape(1, n_pad)
    sid_r = sid_full.reshape(n_pad, 1)
    sid_c = sid_full.reshape(1, n_pad)

    R = n_pad // tq
    C = n_pad // tk
    loss_cost = pl.CostEstimate(
        flops=2 * n_pad * n_pad * dim + 16 * n_pad * n_pad,
        transcendentals=n_pad * n_pad + 8 * n_pad,
        bytes_accessed=n_pad * dim * 4 + 4 * n_pad * 4 + R * 8 * 128 * 4,
    )
    partials = pl.pallas_call(
        functools.partial(_supcon_loss_kernel, inv_T=1.0 / T, n_valid=N,
                          tq=tq, tk=tk),
        out_shape=jax.ShapeDtypeStruct((R, 8, 128), jnp.float32),
        grid_spec=pltpu.PrefetchScalarGridSpec(
            num_scalar_prefetch=0,
            grid=(R, C),
            in_specs=[
                pl.BlockSpec((n_pad, dim), lambda r, c: (0, 0)),  # z resident in VMEM
                pl.BlockSpec((n_pad, 1), lambda r, c: (0, 0)),    # labels (row side)
                pl.BlockSpec((1, n_pad), lambda r, c: (0, 0)),    # labels (col side)
                pl.BlockSpec((n_pad, 1), lambda r, c: (0, 0)),    # sample id (rows)
                pl.BlockSpec((1, n_pad), lambda r, c: (0, 0)),    # sample id (cols)
            ],
            out_specs=pl.BlockSpec((1, 8, 128), lambda r, c: (r, 0, 0)),
            scratch_shapes=[pltpu.VMEM((tq, 1), jnp.float32)] * 6,
        ),
        compiler_params=pltpu.CompilerParams(
            dimension_semantics=("parallel", "arbitrary"),
            vmem_limit_bytes=48 * 1024 * 1024),
        cost_estimate=loss_cost,
    )(z_pad, lab_r, lab_c, sid_r, sid_c)

    ssl_mean = jnp.sum(partials[:, 0, 0]) / N
    sup_mean = jnp.sum(partials[:, 0, 1]) / N
    loss = alpha * ssl_mean + (1.0 - alpha) * sup_mean
    return ssl_mean, sup_mean, loss


def supcon_reference(x1, x2, labels, params, *, T=0.1, alpha=0.5):
    """Pure-JAX reference mirroring the PyTorch math (matmuls use the same
    bf16-operand / f32-accumulation policy as the kernel; all loss math f32)."""
    B = labels.shape[0]
    N = 2 * B
    hp = jax.lax.Precision.HIGHEST
    x = jnp.concatenate([x1.reshape(B, -1), x2.reshape(B, -1)],
                        axis=0).astype(jnp.bfloat16)

    h = jnp.maximum(jnp.dot(x, params["w_enc"].astype(jnp.bfloat16),
                            preferred_element_type=jnp.float32, precision=hp), 0.0)
    p = jnp.dot(h.astype(jnp.bfloat16), params["w1"].astype(jnp.bfloat16),
                preferred_element_type=jnp.float32, precision=hp)
    mu = p.mean(0, keepdims=True)
    var = ((p - mu) ** 2).mean(0, keepdims=True)
    p = ((p - mu) / jnp.sqrt(var + 1e-5) * params["gamma"].reshape(1, -1)
         + params["beta"].reshape(1, -1))
    p = jnp.maximum(p, 0.0)
    z = jnp.dot(p.astype(jnp.bfloat16), params["w2"].astype(jnp.bfloat16),
                preferred_element_type=jnp.float32,
                precision=hp) + params["b2"].reshape(1, -1)
    z = z / jnp.maximum(jnp.linalg.norm(z, axis=1, keepdims=True), 1e-12)

    labels_full = jnp.concatenate([labels, labels]).astype(jnp.int32)
    mask = (labels_full[:, None] == labels_full[None, :]).astype(jnp.float32)
    I = jnp.tile(jnp.eye(B, dtype=jnp.float32), (2, 2))
    logits_mask = 1.0 - jnp.eye(N, dtype=jnp.float32)
    mask = mask * logits_mask
    I = I * logits_mask

    score = jnp.dot(z, z.T, precision=hp) / T
    logits = score - jnp.max(score, axis=1, keepdims=True)
    exp_logits = jnp.exp(logits) * logits_mask
    log_prob = logits - jnp.log(jnp.sum(exp_logits, axis=1, keepdims=True))

    ssl_pos = jnp.where(jnp.sum(I, 1) < 1e-6, 1.0, jnp.sum(I, 1))
    sup_pos = jnp.where(jnp.sum(mask - I, 1) < 1e-6, 1.0, jnp.sum(mask - I, 1))
    ssl_row = -jnp.sum(I * log_prob, 1) / ssl_pos
    sup_row = -jnp.sum((mask - I) * log_prob, 1) / sup_pos
    ssl = ssl_row.reshape(2, B).mean(0)
    sup = sup_row.reshape(2, B).mean(0)
    loss = alpha * ssl + (1.0 - alpha) * sup
    return ssl.mean(), sup.mean(), loss.mean()


if __name__ == "__main__":
    # Small shapes consistent with the module's forward.
    B, Cc, H, W = 4, 4, 8, 8
    in_dim, dim = 64, 128
    F = Cc * H * W
    T, alpha = 0.1, 0.5

    key = jax.random.PRNGKey(0)
    k = jax.random.split(key, 8)
    x1 = jax.random.normal(k[0], (B, Cc, H, W), jnp.float32)
    x2 = jax.random.normal(k[1], (B, Cc, H, W), jnp.float32)
    labels = jax.random.randint(k[2], (B,), 0, 3, jnp.int32)

    params = {
        "w_enc": 0.05 * jax.random.normal(k[3], (F, in_dim), jnp.float32),
        "w1":    0.05 * jax.random.normal(k[4], (in_dim, in_dim), jnp.float32),
        "gamma": jnp.ones((1, in_dim), jnp.float32),
        "beta":  jnp.zeros((1, in_dim), jnp.float32),
        "w2":    0.05 * jax.random.normal(k[5], (in_dim, dim), jnp.float32),
        "b2":    0.01 * jax.random.normal(k[6], (1, dim), jnp.float32),
    }

    ssl, sup, loss = supcon_forward(x1, x2, labels, params, T=T, alpha=alpha)
    jax.block_until_ready((ssl, sup, loss))

    ssl_r, sup_r, loss_r = supcon_reference(x1, x2, labels, params, T=T, alpha=alpha)
    assert jnp.allclose(ssl, ssl_r, rtol=1e-2, atol=5e-3), (ssl, ssl_r)
    assert jnp.allclose(sup, sup_r, rtol=1e-2, atol=5e-3), (sup, sup_r)
    assert jnp.allclose(loss, loss_r, rtol=1e-2, atol=5e-3), (loss, loss_r)

    print("KERNEL_OK")
</pallas_src>

<mosaic_0001>
module attributes {stable_mosaic.version = 11 : i64} {
  func.func @_encode_project_kernel(%arg0: memref<4x256xbf16, #tpu.memory_space<vmem>>, %arg1: memref<4x256xbf16, #tpu.memory_space<vmem>>, %arg2: memref<256x64xbf16, #tpu.memory_space<vmem>>, %arg3: memref<64x64xbf16, #tpu.memory_space<vmem>>, %arg4: memref<1x64xf32, #tpu.memory_space<vmem>>, %arg5: memref<1x64xf32, #tpu.memory_space<vmem>>, %arg6: memref<64x128xbf16, #tpu.memory_space<vmem>>, %arg7: memref<1x128xf32, #tpu.memory_space<vmem>>, %arg8: memref<128x128xf32, #tpu.memory_space<vmem>>) attributes {dimension_semantics = [], scalar_prefetch = 0 : i64, scratch_operands = 0 : i64, tpu.core_type = #tpu.core_type<tc>} {
    %c0 = arith.constant 0 : index
    %c0_0 = arith.constant 0 : index
    %0 = vector.load %arg0[%c0, %c0_0] : memref<4x256xbf16, #tpu.memory_space<vmem>>, vector<4x256xbf16>
    %c0_1 = arith.constant 0 : index
    %c0_2 = arith.constant 0 : index
    %1 = vector.load %arg2[%c0_1, %c0_2] : memref<256x64xbf16, #tpu.memory_space<vmem>>, vector<256x64xbf16>
    %cst = arith.constant dense<0.000000e+00> : vector<4x64xf32>
    %2 = tpu.matmul %0, %1, %cst {dimension_numbers = #tpu.dot_dimension_numbers<[1], [0], [0], [1], [0, 0, 1, 1], [], []>} : vector<4x256xbf16>, vector<256x64xbf16>, vector<4x64xf32> -> vector<4x64xf32>
    %cst_3 = arith.constant 0.000000e+00 : f32
    %3 = vector.broadcast %cst_3 : f32 to vector<4x64xf32>
    %4 = arith.maximumf %2, %3 : vector<4x64xf32>
    %5 = arith.truncf %4 : vector<4x64xf32> to vector<4x64xbf16>
    %c0_4 = arith.constant 0 : index
    %c0_5 = arith.constant 0 : index
    %6 = vector.load %arg3[%c0_4, %c0_5] : memref<64x64xbf16, #tpu.memory_space<vmem>>, vector<64x64xbf16>
    %cst_6 = arith.constant dense<0.000000e+00> : vector<4x64xf32>
    %7 = tpu.matmul %5, %6, %cst_6 {dimension_numbers = #tpu.dot_dimension_numbers<[1], [0], [0], [1], [0, 0, 1, 1], [], []>} : vector<4x64xbf16>, vector<64x64xbf16>, vector<4x64xf32> -> vector<4x64xf32>
    %c0_7 = arith.constant 0 : index
    %c0_8 = arith.constant 0 : index
    %8 = vector.load %arg1[%c0_7, %c0_8] : memref<4x256xbf16, #tpu.memory_space<vmem>>, vector<4x256xbf16>
    %c0_9 = arith.constant 0 : index
    %c0_10 = arith.constant 0 : index
    %9 = vector.load %arg2[%c0_9, %c0_10] : memref<256x64xbf16, #tpu.memory_space<vmem>>, vector<256x64xbf16>
    %cst_11 = arith.constant dense<0.000000e+00> : vector<4x64xf32>
    %10 = tpu.matmul %8, %9, %cst_11 {dimension_numbers = #tpu.dot_dimension_numbers<[1], [0], [0], [1], [0, 0, 1, 1], [], []>} : vector<4x256xbf16>, vector<256x64xbf16>, vector<4x64xf32> -> vector<4x64xf32>
    %cst_12 = arith.constant 0.000000e+00 : f32
    %11 = vector.broadcast %cst_12 : f32 to vector<4x64xf32>
    %12 = arith.maximumf %10, %11 : vector<4x64xf32>
    %13 = arith.truncf %12 : vector<4x64xf32> to vector<4x64xbf16>
    %c0_13 = arith.constant 0 : index
    %c0_14 = arith.constant 0 : index
    %14 = vector.load %arg3[%c0_13, %c0_14] : memref<64x64xbf16, #tpu.memory_space<vmem>>, vector<64x64xbf16>
    %cst_15 = arith.constant dense<0.000000e+00> : vector<4x64xf32>
    %15 = tpu.matmul %13, %14, %cst_15 {dimension_numbers = #tpu.dot_dimension_numbers<[1], [0], [0], [1], [0, 0, 1, 1], [], []>} : vector<4x64xbf16>, vector<64x64xbf16>, vector<4x64xf32> -> vector<4x64xf32>
    %cst_16 = arith.constant dense<0.000000e+00> : vector<64xf32>
    %16 = vector.multi_reduction <add>, %7, %cst_16 [0] : vector<4x64xf32> to vector<64xf32>
    %17 = vector.shape_cast %16 : vector<64xf32> to vector<1x64xf32>
    %cst_17 = arith.constant dense<0.000000e+00> : vector<64xf32>
    %18 = vector.multi_reduction <add>, %15, %cst_17 [0] : vector<4x64xf32> to vector<64xf32>
    %19 = vector.shape_cast %18 : vector<64xf32> to vector<1x64xf32>
    %20 = arith.addf %17, %19 : vector<1x64xf32>
    %21 = arith.mulf %7, %7 : vector<4x64xf32>
    %cst_18 = arith.constant dense<0.000000e+00> : vector<64xf32>
    %22 = vector.multi_reduction <add>, %21, %cst_18 [0] : vector<4x64xf32> to vector<64xf32>
    %23 = vector.shape_cast %22 : vector<64xf32> to vector<1x64xf32>
    %24 = arith.mulf %15, %15 : vector<4x64xf32>
    %cst_19 = arith.constant dense<0.000000e+00> : vector<64xf32>
    %25 = vector.multi_reduction <add>, %24, %cst_19 [0] : vector<4x64xf32> to vector<64xf32>
    %26 = vector.shape_cast %25 : vector<64xf32> to vector<1x64xf32>
    %27 = arith.addf %23, %26 : vector<1x64xf32>
    %cst_20 = arith.constant 1.250000e-01 : f32
    %28 = vector.broadcast %cst_20 : f32 to vector<1x64xf32>
    %29 = arith.mulf %20, %28 : vector<1x64xf32>
    %cst_21 = arith.constant 1.250000e-01 : f32
    %30 = vector.broadcast %cst_21 : f32 to vector<1x64xf32>
    %31 = arith.mulf %27, %30 : vector<1x64xf32>
    %32 = arith.mulf %29, %29 : vector<1x64xf32>
    %33 = arith.subf %31, %32 : vector<1x64xf32>
    %cst_22 = arith.constant 9.99999974E-6 : f32
    %34 = vector.broadcast %cst_22 : f32 to vector<1x64xf32>
    %35 = arith.addf %33, %34 : vector<1x64xf32>
    %36 = math.rsqrt %35 : vector<1x64xf32>
    %c0_23 = arith.constant 0 : index
    %c0_24 = arith.constant 0 : index
    %37 = vector.load %arg4[%c0_23, %c0_24] : memref<1x64xf32, #tpu.memory_space<vmem>>, vector<1x64xf32>
    %38 = arith.mulf %37, %36 : vector<1x64xf32>
    %c0_25 = arith.constant 0 : index
    %c0_26 = arith.constant 0 : index
    %39 = vector.load %arg5[%c0_25, %c0_26] : memref<1x64xf32, #tpu.memory_space<vmem>>, vector<1x64xf32>
    %40 = arith.mulf %29, %38 : vector<1x64xf32>
    %41 = arith.subf %39, %40 : vector<1x64xf32>
    %cst_27 = arith.constant 0.000000e+00 : f32
    %42 = vector.broadcast %cst_27 : f32 to vector<128x128xf32>
    %c0_28 = arith.constant 0 : index
    %c0_29 = arith.constant 0 : index
    %43 = vector.load %arg8[%c0_28, %c0_29] : memref<128x128xf32, #tpu.memory_space<vmem>>, vector<128x128xf32>
    tpu.vector_store %arg8[%c0_28, %c0_29], %42 {strides = array<i32>} : memref<128x128xf32, #tpu.memory_space<vmem>>, vector<128x128xf32>,
    %44 = vector.broadcast %38 : vector<1x64xf32> to vector<4x64xf32>
    %45 = arith.mulf %7, %44 : vector<4x64xf32>
    %46 = vector.broadcast %41 : vector<1x64xf32> to vector<4x64xf32>
    %47 = arith.addf %45, %46 : vector<4x64xf32>
    %cst_30 = arith.constant 0.000000e+00 : f32
    %48 = vector.broadcast %cst_30 : f32 to vector<4x64xf32>
    %49 = arith.maximumf %47, %48 : vector<4x64xf32>
    %50 = arith.truncf %49 : vector<4x64xf32> to vector<4x64xbf16>
    %c0_31 = arith.constant 0 : index
    %c0_32 = arith.constant 0 : index
    %51 = vector.load %arg6[%c0_31, %c0_32] : memref<64x128xbf16, #tpu.memory_space<vmem>>, vector<64x128xbf16>
    %cst_33 = arith.constant dense<0.000000e+00> : vector<4x128xf32>
    %52 = tpu.matmul %50, %51, %cst_33 {dimension_numbers = #tpu.dot_dimension_numbers<[1], [0], [0], [1], [0, 0, 1, 1], [], []>} : vector<4x64xbf16>, vector<64x128xbf16>, vector<4x128xf32> -> vector<4x128xf32>
    %c0_34 = arith.constant 0 : index
    %c0_35 = arith.constant 0 : index
    %53 = vector.load %arg7[%c0_34, %c0_35] : memref<1x128xf32, #tpu.memory_space<vmem>>, vector<1x128xf32>
    %54 = vector.broadcast %53 : vector<1x128xf32> to vector<4x128xf32>
    %55 = arith.addf %52, %54 : vector<4x128xf32>
    %56 = arith.mulf %55, %55 : vector<4x128xf32>
    %cst_36 = arith.constant dense<0.000000e+00> : vector<4xf32>
    %57 = vector.multi_reduction <add>, %56, %cst_36 [1] : vector<4x128xf32> to vector<4xf32>
    %58 = vector.shape_cast %57 : vector<4xf32> to vector<4x1xf32>
    %cst_37 = arith.constant 1.000000e-24 : f32
    %59 = vector.broadcast %cst_37 : f32 to vector<4x1xf32>
    %60 = arith.maximumf %58, %59 : vector<4x1xf32>
    %61 = math.rsqrt %60 : vector<4x1xf32>
    %62 = vector.broadcast %61 : vector<4x1xf32> to vector<4x128xf32>
    %63 = arith.mulf %55, %62 : vector<4x128xf32>
    %c0_38 = arith.constant 0 : index
    %c0_39 = arith.constant 0 : index
    %64 = vector.load %arg8[%c0_38, %c0_39] : memref<128x128xf32, #tpu.memory_space<vmem>>, vector<4x128xf32>
    tpu.vector_store %arg8[%c0_38, %c0_39], %63 {strides = array<i32>} : memref<128x128xf32, #tpu.memory_space<vmem>>, vector<4x128xf32>,
    %65 = vector.broadcast %38 : vector<1x64xf32> to vector<4x64xf32>
    %66 = arith.mulf %15, %65 : vector<4x64xf32>
    %67 = vector.broadcast %41 : vector<1x64xf32> to vector<4x64xf32>
    %68 = arith.addf %66, %67 : vector<4x64xf32>
    %cst_40 = arith.constant 0.000000e+00 : f32
    %69 = vector.broadcast %cst_40 : f32 to vector<4x64xf32>
    %70 = arith.maximumf %68, %69 : vector<4x64xf32>
    %71 = arith.truncf %70 : vector<4x64xf32> to vector<4x64xbf16>
    %c0_41 = arith.constant 0 : index
    %c0_42 = arith.constant 0 : index
    %72 = vector.load %arg6[%c0_41, %c0_42] : memref<64x128xbf16, #tpu.memory_space<vmem>>, vector<64x128xbf16>
    %cst_43 = arith.constant dense<0.000000e+00> : vector<4x128xf32>
    %73 = tpu.matmul %71, %72, %cst_43 {dimension_numbers = #tpu.dot_dimension_numbers<[1], [0], [0], [1], [0, 0, 1, 1], [], []>} : vector<4x64xbf16>, vector<64x128xbf16>, vector<4x128xf32> -> vector<4x128xf32>
    %c0_44 = arith.constant 0 : index
    %c0_45 = arith.constant 0 : index
    %74 = vector.load %arg7[%c0_44, %c0_45] : memref<1x128xf32, #tpu.memory_space<vmem>>, vector<1x128xf32>
    %75 = vector.broadcast %74 : vector<1x128xf32> to vector<4x128xf32>
    %76 = arith.addf %73, %75 : vector<4x128xf32>
    %77 = arith.mulf %76, %76 : vector<4x128xf32>
    %cst_46 = arith.constant dense<0.000000e+00> : vector<4xf32>
    %78 = vector.multi_reduction <add>, %77, %cst_46 [1] : vector<4x128xf32> to vector<4xf32>
    %79 = vector.shape_cast %78 : vector<4xf32> to vector<4x1xf32>
    %cst_47 = arith.constant 1.000000e-24 : f32
    %80 = vector.broadcast %cst_47 : f32 to vector<4x1xf32>
    %81 = arith.maximumf %79, %80 : vector<4x1xf32>
    %82 = math.rsqrt %81 : vector<4x1xf32>
    %83 = vector.broadcast %82 : vector<4x1xf32> to vector<4x128xf32>
    %84 = arith.mulf %76, %83 : vector<4x128xf32>
    %c4 = arith.constant 4 : index
    %c0_48 = arith.constant 0 : index
    %85 = vector.load %arg8[%c4, %c0_48] : memref<128x128xf32, #tpu.memory_space<vmem>>, vector<4x128xf32>
    tpu.vector_store %arg8[%c4, %c0_48], %84 {strides = array<i32>} : memref<128x128xf32, #tpu.memory_space<vmem>>, vector<4x128xf32>,
    return
  }
}

</mosaic_0001>

<llo_original>
// kernel: tpu_custom_call.1
$region0: #{tpu_custom_call.1}
  #allocation0 [shape = 'u32[]', space=smem, size = 0x4, offset = 0x4, fixed_abs, tag = 'smem constant byte address 0x4 - core index']
  #allocation1 [shape = 'u32[144,128]{1,0:T(1,128)}', space=vmem, size = 0x12000, scoped, tag = 'internal scratch']
  %s0 = inlined_call_operand.vmem [shape: bf16[4,256], index: 0, kind: input, shape index: {}]
  %s1 = inlined_call_operand.vmem [shape: bf16[4,256], index: 1, kind: input, shape index: {}]
  %s2 = inlined_call_operand.vmem [shape: bf16[256,64], index: 2, kind: input, shape index: {}]
  %s3 = inlined_call_operand.vmem [shape: bf16[64,64], index: 3, kind: input, shape index: {}]
  %s4 = inlined_call_operand.vmem [shape: f32[1,64], index: 4, kind: input, shape index: {}]
  %s5 = inlined_call_operand.vmem [shape: f32[1,64], index: 5, kind: input, shape index: {}]
  %s6 = inlined_call_operand.vmem [shape: bf16[64,128], index: 6, kind: input, shape index: {}]
  %s7 = inlined_call_operand.vmem [shape: f32[1,128], index: 7, kind: input, shape index: {}]
  %s8 = inlined_call_operand.hbm [shape: f32[128,128], index: 8, kind: output, shape index: {}]
  %s9 = sld [smem:[#allocation0]]
  $region42: #{tpu_custom_call.1} parent=0
    _
  %s11 = ssub.s32 1, %s9
  %s12 = scalar_select 0, %s11, %s9
  $region1: #{tpu_custom_call.1} parent=0
    #allocation2 [shape = 'u8[65536]{0}', space=vmem, size = 0x10000, scoped, tag = 'output window, operand 0, single buffered']
    #allocation3 [shape = 's32[1]{0}', space=sflag, size = 0x4, scoped, tag = 'scoped memory for tpu_custom_call.1']
    %13 = vsyncpa [#allocation3], 0
    // Predicated region
    $region2: #{tpu_custom_call.1} parent=1 // pred_check
      _
    $region3: #{tpu_custom_call.1} parent=1 // pred_check_branch
      %15 = sbr.rel (0) target = $region5
    $region4: #{tpu_custom_call.1} parent=1 // pred_region
      _
    $region5: #{tpu_custom_call.1} parent=1 // pred_fallthru
      _
    // Predicated region
    $region6: #{tpu_custom_call.1} parent=1 // pred_check
      _
    $region7: #{tpu_custom_call.1} parent=1 // pred_check_branch
      %17 = sbr.rel (0) target = $region9
    $region8: #{tpu_custom_call.1} parent=1 // pred_region
      _
    $region9: #{tpu_custom_call.1} parent=1 // pred_fallthru
      _
    // Predicated region
    $region10: #{tpu_custom_call.1} parent=1 // pred_check
      _
    $region11: #{tpu_custom_call.1} parent=1 // pred_check_branch
      %19 = sbr.rel (0) target = $region13
    $region12: #{tpu_custom_call.1} parent=1 // pred_region
      _
    $region13: #{tpu_custom_call.1} parent=1 // pred_fallthru
      _
    // Predicated region
    $region14: #{tpu_custom_call.1} parent=1 // pred_check
      _
    $region15: #{tpu_custom_call.1} parent=1 // pred_check_branch
      %21 = sbr.rel (0) target = $region17
    $region16: #{tpu_custom_call.1} parent=1 // pred_region
      _
    $region17: #{tpu_custom_call.1} parent=1 // pred_fallthru
      _
    // Predicated region
    $region18: #{tpu_custom_call.1} parent=1 // pred_check
      _
    $region19: #{tpu_custom_call.1} parent=1 // pred_check_branch
      %23 = sbr.rel (0) target = $region21
    $region20: #{tpu_custom_call.1} parent=1 // pred_region
      _
    $region21: #{tpu_custom_call.1} parent=1 // pred_fallthru
      _
    // Predicated region
    $region22: #{tpu_custom_call.1} parent=1 // pred_check
      _
    $region23: #{tpu_custom_call.1} parent=1 // pred_check_branch
      %25 = sbr.rel (0) target = $region25
    $region24: #{tpu_custom_call.1} parent=1 // pred_region
      _
    $region25: #{tpu_custom_call.1} parent=1 // pred_fallthru
      _
    // Predicated region
    $region26: #{tpu_custom_call.1} parent=1 // pred_check
      _
    $region27: #{tpu_custom_call.1} parent=1 // pred_check_branch
      %27 = sbr.rel (0) target = $region29
    $region28: #{tpu_custom_call.1} parent=1 // pred_region
      _
    $region29: #{tpu_custom_call.1} parent=1 // pred_fallthru
      _
    // Predicated region
    $region30: #{tpu_custom_call.1} parent=1 // pred_check
      _
    $region31: #{tpu_custom_call.1} parent=1 // pred_check_branch
      %29 = sbr.rel (0) target = $region33
    $region32: #{tpu_custom_call.1} parent=1 // pred_region
      _
    $region33: #{tpu_custom_call.1} parent=1 // pred_fallthru
      _
    %v31 = vld [vmem:[%s0] sm:$0xf]
    %v32 = vld [vmem:[%s2] sm:$0xf]
    %v33 = vld [vmem:[%s2 + $0x4] sm:$0xf]
    %v34 = vld [vmem:[%s2 + $0x8] sm:$0xf]
    %v35 = vld [vmem:[%s2 + $0xc] sm:$0xf]
    %v36 = vld [vmem:[%s2 + $0x10] sm:$0xf]
    %v37 = vld [vmem:[%s2 + $0x14] sm:$0xf]
    %v38 = vld [vmem:[%s2 + $0x18] sm:$0xf]
    %v39 = vld [vmem:[%s2 + $0x1c] sm:$0xf]
    %v40 = vld [vmem:[%s2 + $0x20] sm:$0xf]
    %v41 = vld [vmem:[%s2 + $0x24] sm:$0xf]
    %v42 = vld [vmem:[%s2 + $0x28] sm:$0xf]
    %v43 = vld [vmem:[%s2 + $0x2c] sm:$0xf]
    %v44 = vld [vmem:[%s2 + $0x30] sm:$0xf]
    %v45 = vld [vmem:[%s2 + $0x34] sm:$0xf]
    %v46 = vld [vmem:[%s2 + $0x38] sm:$0xf]
    %v47 = vld [vmem:[%s2 + $0x3c] sm:$0xf]
    %v48 = vld [vmem:[%s2 + $0x40] sm:$0xf]
    %v49 = vld [vmem:[%s2 + $0x44] sm:$0xf]
    %v50 = vld [vmem:[%s2 + $0x48] sm:$0xf]
    %v51 = vld [vmem:[%s2 + $0x4c] sm:$0xf]
    %v52 = vld [vmem:[%s2 + $0x50] sm:$0xf]
    %v53 = vld [vmem:[%s2 + $0x54] sm:$0xf]
    %v54 = vld [vmem:[%s2 + $0x58] sm:$0xf]
    %v55 = vld [vmem:[%s2 + $0x5c] sm:$0xf]
    %v56 = vld [vmem:[%s2 + $0x60] sm:$0xf]
    %v57 = vld [vmem:[%s2 + $0x64] sm:$0xf]
    %v58 = vld [vmem:[%s2 + $0x68] sm:$0xf]
    %v59 = vld [vmem:[%s2 + $0x6c] sm:$0xf]
    %v60 = vld [vmem:[%s2 + $0x70] sm:$0xf]
    %v61 = vld [vmem:[%s2 + $0x74] sm:$0xf]
    %v62 = vld [vmem:[%s2 + $0x78] sm:$0xf]
    %v63 = vld [vmem:[%s2 + $0x7c] sm:$0xf]
    %v66 = vunpack.c.l.s4 1983009808
    %v67 = vunpack.c.0.s8 %v66
    %v68 = vlaneseq
    %v69 = vshrl.u32 %v68, 7
    %v70 = vsub.s32 %v67, %v69
    %v71 = vrot.slane %v31, %v70
    %v72 = vcombine.high %v71, %v71
    %v107 = vunpack.c.l.b16 %v32
    %v108 = vunpack.c.l.b16 %v33
    %v109 = vunpack.c.l.b16 %v34
    %v110 = vunpack.c.l.b16 %v35
    %v111 = vunpack.c.l.b16 %v36
    %v112 = vunpack.c.l.b16 %v37
    %v113 = vunpack.c.l.b16 %v38
    %v114 = vunpack.c.l.b16 %v39
    %v115 = vunpack.c.l.b16 %v40
    %v116 = vunpack.c.l.b16 %v41
    %v117 = vunpack.c.l.b16 %v42
    %v118 = vunpack.c.l.b16 %v43
    %v119 = vunpack.c.l.b16 %v44
    %v120 = vunpack.c.l.b16 %v45
    %v121 = vunpack.c.l.b16 %v46
    %v122 = vunpack.c.l.b16 %v47
    %v123 = vunpack.c.l.b16 %v48
    %v124 = vunpack.c.l.b16 %v49
    %v125 = vunpack.c.l.b16 %v50
    %v126 = vunpack.c.l.b16 %v51
    %v127 = vunpack.c.l.b16 %v52
    %v128 = vunpack.c.l.b16 %v53
    %v129 = vunpack.c.l.b16 %v54
    %v130 = vunpack.c.l.b16 %v55
    %v131 = vunpack.c.l.b16 %v56
    %v132 = vunpack.c.l.b16 %v57
    %v133 = vunpack.c.l.b16 %v58
    %v134 = vunpack.c.l.b16 %v59
    %v135 = vunpack.c.l.b16 %v60
    %v136 = vunpack.c.l.b16 %v61
    %v137 = vunpack.c.l.b16 %v62
    %v138 = vunpack.c.l.b16 %v63
    %v139 = vpack.c.b16 %v108, %v107
    %v140 = vpack.c.b16 %v110, %v109
    %v141 = vpack.c.b16 %v112, %v111
    %v142 = vpack.c.b16 %v114, %v113
    %v143 = vpack.c.b16 %v116, %v115
    %v144 = vpack.c.b16 %v118, %v117
    %v145 = vpack.c.b16 %v120, %v119
    %v146 = vpack.c.b16 %v122, %v121
    %v147 = vpack.c.b16 %v124, %v123
    %v148 = vpack.c.b16 %v126, %v125
    %v149 = vpack.c.b16 %v128, %v127
    %v150 = vpack.c.b16 %v130, %v129
    %v151 = vpack.c.b16 %v132, %v131
    %v152 = vpack.c.b16 %v134, %v133
    %v153 = vpack.c.b16 %v136, %v135
    %v154 = vpack.c.b16 %v138, %v137
    %171 = vmatprep.subr.bf16.mxu0 0
    %172 = vmatpush1.bf16.msra.mxu0 %v146
    %173 = vmatprep.subr.bf16.mxu0 0
    %174 = vmatpush1.bf16.msra.mxu0 %v145
    %175 = vmatprep.subr.bf16.mxu0 0
    %176 = vmatpush1.bf16.msra.mxu0 %v144
    %177 = vmatprep.subr.bf16.mxu0 0
    %178 = vmatpush1.bf16.msra.mxu0 %v143
    %179 = vmatprep.subr.bf16.mxu0 0
    %180 = vmatpush1.bf16.msra.mxu0 %v142
    %181 = vmatprep.subr.bf16.mxu0 0
    %182 = vmatpush1.bf16.msra.mxu0 %v141
    %183 = vmatprep.subr.bf16.mxu0 0
    %184 = vmatpush1.bf16.msra.mxu0 %v140
    %185 = vmatprep.subr.bf16.mxu0 0
    %186 = vmatpush1.bf16.msra.mxu0 %v139
    %187 = vmatprep.subr.bf16.mxu0 0
    %188 = vmatpush2.bf16.msra.mxu0 %v154
    %189 = vmatprep.subr.bf16.mxu0 0
    %190 = vmatpush2.bf16.msra.mxu0 %v153
    %191 = vmatprep.subr.bf16.mxu0 0
    %192 = vmatpush2.bf16.msra.mxu0 %v152
    %193 = vmatprep.subr.bf16.mxu0 0
    %194 = vmatpush2.bf16.msra.mxu0 %v151
    %195 = vmatprep.subr.bf16.mxu0 0
    %196 = vmatpush2.bf16.msra.mxu0 %v150
    %197 = vmatprep.subr.bf16.mxu0 0
    %198 = vmatpush2.bf16.msra.mxu0 %v149
    %199 = vmatprep.subr.bf16.mxu0 0
    %200 = vmatpush2.bf16.msra.mxu0 %v148
    %201 = vmatprep.subr.bf16.mxu0 0
    %202 = vmatpush2.bf16.msra.mxu0 %v147
    %203 = vmatprep.mubr.bf16.mxu0 %v72
    %204 = vmatmul.mubr.bf16.gmra.mxu0 %v71
    %v205 = vpop.f32.mrf.mxu0
    %v206 = vadd.f32 0.0, %v205
    %v207 = vpop.f32.mrf.mxu0
    %v208 = vpop.f32.mrf.mxu0
    %v209 = vpop.f32.mrf.mxu0
    %210 = vdwg.mxu0
    %v211 = vmax.f32 %v206, 0.0
    %v212 = vpack.c.bf16 %v211, %v211
    %v213 = vld [vmem:[%s3] sm:$0xf]
    %v214 = vld [vmem:[%s3 + $0x4] sm:$0xf]
    %v215 = vld [vmem:[%s3 + $0x8] sm:$0xf]
    %v216 = vld [vmem:[%s3 + $0xc] sm:$0xf]
    %v217 = vld [vmem:[%s3 + $0x10] sm:$0xf]
    %v218 = vld [vmem:[%s3 + $0x14] sm:$0xf]
    %v219 = vld [vmem:[%s3 + $0x18] sm:$0xf]
    %v220 = vld [vmem:[%s3 + $0x1c] sm:$0xf]
    %v229 = vunpack.c.l.b16 %v213
    %v230 = vunpack.c.l.b16 %v214
    %v231 = vunpack.c.l.b16 %v215
    %v232 = vunpack.c.l.b16 %v216
    %v233 = vunpack.c.l.b16 %v217
    %v234 = vunpack.c.l.b16 %v218
    %v235 = vunpack.c.l.b16 %v219
    %v236 = vunpack.c.l.b16 %v220
    %v237 = vpack.c.b16 %v230, %v229
    %v238 = vpack.c.b16 %v232, %v231
    %v239 = vpack.c.b16 %v234, %v233
    %v240 = vpack.c.b16 %v236, %v235
    %vm245 = vcmask 523264
    %v247 = vsel %vm245, %v212, 0
    %249 = vmatprep.subr.bf16.mxu0 0
    %250 = vmatpush1.bf16.msra.mxu0 0
    %251 = vmatprep.subr.bf16.mxu0 0
    %252 = vmatpush1.bf16.msra.mxu0 0
    %253 = vmatprep.subr.bf16.mxu0 0
    %254 = vmatpush1.bf16.msra.mxu0 0
    %255 = vmatprep.subr.bf16.mxu0 0
    %256 = vmatpush1.bf16.msra.mxu0 0
    %257 = vmatprep.subr.bf16.mxu0 0
    %258 = vmatpush1.bf16.msra.mxu0 %v240
    %259 = vmatprep.subr.bf16.mxu0 0
    %260 = vmatpush1.bf16.msra.mxu0 %v239
    %261 = vmatprep.subr.bf16.mxu0 0
    %262 = vmatpush1.bf16.msra.mxu0 %v238
    %263 = vmatprep.subr.bf16.mxu0 0
    %264 = vmatpush1.bf16.msra.mxu0 %v237
    %265 = vmatprep.subr.bf16.mxu0 0
    %266 = vmatpush2.bf16.msra.mxu0 0
    %267 = vmatprep.subr.bf16.mxu0 0
    %268 = vmatpush2.bf16.msra.mxu0 0
    %269 = vmatprep.subr.bf16.mxu0 0
    %270 = vmatpush2.bf16.msra.mxu0 0
    %271 = vmatprep.subr.bf16.mxu0 0
    %272 = vmatpush2.bf16.msra.mxu0 0
    %273 = vmatprep.subr.bf16.mxu0 0
    %274 = vmatpush2.bf16.msra.mxu0 0
    %275 = vmatprep.subr.bf16.mxu0 0
    %276 = vmatpush2.bf16.msra.mxu0 0
    %277 = vmatprep.subr.bf16.mxu0 0
    %278 = vmatpush2.bf16.msra.mxu0 0
    %279 = vmatprep.subr.bf16.mxu0 0
    %280 = vmatpush2.bf16.msra.mxu0 0
    %281 = vmatprep.mubr.bf16.mxu0 0
    %282 = vmatmul.mubr.bf16.gmra.mxu0 %v247
    %v283 = vpop.f32.mrf.mxu0
    %v284 = vadd.f32 0.0, %v283
    %v285 = vpop.f32.mrf.mxu0
    %v286 = vpop.f32.mrf.mxu0
    %v287 = vpop.f32.mrf.mxu0
    %288 = vdwg.mxu0
    %v289 = vld [vmem:[%s1] sm:$0xf]
    %v292 = vunpack.c.l.s4 1983009808
    %v293 = vunpack.c.0.s8 %v292
    %v294 = vlaneseq
    %v295 = vshrl.u32 %v294, 7
    %v296 = vsub.s32 %v293, %v295
    %v297 = vrot.slane %v289, %v296
    %v298 = vcombine.high %v297, %v297
    %301 = vmatprep.subr.bf16.mxu0 0
    %302 = vmatpush1.bf16.msra.mxu0 %v146
    %303 = vmatprep.subr.bf16.mxu0 0
    %304 = vmatpush1.bf16.msra.mxu0 %v145
    %305 = vmatprep.subr.bf16.mxu0 0
    %306 = vmatpush1.bf16.msra.mxu0 %v144
    %307 = vmatprep.subr.bf16.mxu0 0
    %308 = vmatpush1.bf16.msra.mxu0 %v143
    %309 = vmatprep.subr.bf16.mxu0 0
    %310 = vmatpush1.bf16.msra.mxu0 %v142
    %311 = vmatprep.subr.bf16.mxu0 0
    %312 = vmatpush1.bf16.msra.mxu0 %v141
    %313 = vmatprep.subr.bf16.mxu0 0
    %314 = vmatpush1.bf16.msra.mxu0 %v140
    %315 = vmatprep.subr.bf16.mxu0 0
    %316 = vmatpush1.bf16.msra.mxu0 %v139
    %317 = vmatprep.subr.bf16.mxu0 0
    %318 = vmatpush2.bf16.msra.mxu0 %v154
    %319 = vmatprep.subr.bf16.mxu0 0
    %320 = vmatpush2.bf16.msra.mxu0 %v153
    %321 = vmatprep.subr.bf16.mxu0 0
    %322 = vmatpush2.bf16.msra.mxu0 %v152
    %323 = vmatprep.subr.bf16.mxu0 0
    %324 = vmatpush2.bf16.msra.mxu0 %v151
    %325 = vmatprep.subr.bf16.mxu0 0
    %326 = vmatpush2.bf16.msra.mxu0 %v150
    %327 = vmatprep.subr.bf16.mxu0 0
    %328 = vmatpush2.bf16.msra.mxu0 %v149
    %329 = vmatprep.subr.bf16.mxu0 0
    %330 = vmatpush2.bf16.msra.mxu0 %v148
    %331 = vmatprep.subr.bf16.mxu0 0
    %332 = vmatpush2.bf16.msra.mxu0 %v147
    %333 = vmatprep.mubr.bf16.mxu0 %v298
    %334 = vmatmul.mubr.bf16.gmra.mxu0 %v297
    %v335 = vpop.f32.mrf.mxu0
    %v336 = vadd.f32 0.0, %v335
    %v337 = vpop.f32.mrf.mxu0
    %v338 = vpop.f32.mrf.mxu0
    %v339 = vpop.f32.mrf.mxu0
    %340 = vdwg.mxu0
    %v341 = vmax.f32 %v336, 0.0
    %v342 = vpack.c.bf16 %v341, %v341
    %v344 = vsel %vm245, %v342, 0
    %346 = vmatprep.subr.bf16.mxu0 0
    %347 = vmatpush1.bf16.msra.mxu0 0
    %348 = vmatprep.subr.bf16.mxu0 0
    %349 = vmatpush1.bf16.msra.mxu0 0
    %350 = vmatprep.subr.bf16.mxu0 0
    %351 = vmatpush1.bf16.msra.mxu0 0
    %352 = vmatprep.subr.bf16.mxu0 0
    %353 = vmatpush1.bf16.msra.mxu0 0
    %354 = vmatprep.subr.bf16.mxu0 0
    %355 = vmatpush1.bf16.msra.mxu0 %v240
    %356 = vmatprep.subr.bf16.mxu0 0
    %357 = vmatpush1.bf16.msra.mxu0 %v239
    %358 = vmatprep.subr.bf16.mxu0 0
    %359 = vmatpush1.bf16.msra.mxu0 %v238
    %360 = vmatprep.subr.bf16.mxu0 0
    %361 = vmatpush1.bf16.msra.mxu0 %v237
    %362 = vmatprep.subr.bf16.mxu0 0
    %363 = vmatpush2.bf16.msra.mxu0 0
    %364 = vmatprep.subr.bf16.mxu0 0
    %365 = vmatpush2.bf16.msra.mxu0 0
    %366 = vmatprep.subr.bf16.mxu0 0
    %367 = vmatpush2.bf16.msra.mxu0 0
    %368 = vmatprep.subr.bf16.mxu0 0
    %369 = vmatpush2.bf16.msra.mxu0 0
    %370 = vmatprep.subr.bf16.mxu0 0
    %371 = vmatpush2.bf16.msra.mxu0 0
    %372 = vmatprep.subr.bf16.mxu0 0
    %373 = vmatpush2.bf16.msra.mxu0 0
    %374 = vmatprep.subr.bf16.mxu0 0
    %375 = vmatpush2.bf16.msra.mxu0 0
    %376 = vmatprep.subr.bf16.mxu0 0
    %377 = vmatpush2.bf16.msra.mxu0 0
    %378 = vmatprep.mubr.bf16.mxu0 0
    %379 = vmatmul.mubr.bf16.gmra.mxu0 %v344
    %v380 = vpop.f32.mrf.mxu0
    %v381 = vadd.f32 0.0, %v380
    %v382 = vpop.f32.mrf.mxu0
    %v383 = vpop.f32.mrf.mxu0
    %v384 = vpop.f32.mrf.mxu0
    %385 = vdwg.mxu0
    %vm386 = vcmask 519168
    %v387 = vsel %vm386, %v284, 0.0
    %v388 = vrot.slane %v387, 4
    %v389 = vadd.f32 %v387, %v388
    %v390 = vrot.slane %v389, 2
    %v391 = vadd.f32 %v389, %v390
    %v392 = vrot.slane %v391, 1
    %v393 = vadd.f32 %v391, %v392
    %v394 = vsel %vm386, %v381, 0.0
    %v395 = vrot.slane %v394, 4
    %v396 = vadd.f32 %v394, %v395
    %v397 = vrot.slane %v396, 2
    %v398 = vadd.f32 %v396, %v397
    %v399 = vrot.slane %v398, 1
    %v400 = vadd.f32 %v398, %v399
    %v401 = vadd.f32 %v393, %v400
    %v402 = vmul.f32 %v284, %v284
    %v403 = vsel %vm386, %v402, 0.0
    %v404 = vrot.slane %v403, 4
    %v405 = vadd.f32 %v403, %v404
    %v406 = vrot.slane %v405, 2
    %v407 = vadd.f32 %v405, %v406
    %v408 = vrot.slane %v407, 1
    %v409 = vadd.f32 %v407, %v408
    %v410 = vmul.f32 %v381, %v381
    %v411 = vsel %vm386, %v410, 0.0
    %v412 = vrot.slane %v411, 4
    %v413 = vadd.f32 %v411, %v412
    %v414 = vrot.slane %v413, 2
    %v415 = vadd.f32 %v413, %v414
    %v416 = vrot.slane %v415, 1
    %v417 = vadd.f32 %v415, %v416
    %v418 = vadd.f32 %v409, %v417
    %v419 = vmul.f32 %v401, 0.125
    %v420 = vmul.f32 %v418, 0.125
    %v421 = vmul.f32 %v419, %v419
    %v422 = vsub.f32 %v420, %v421
    %v423 = vadd.f32 %v422, 1e-05
    %v424 = vrsqrt.pop %v423
    %v425 = vld [vmem:[%s4] sm:$0x1]
    %v426 = vmul.f32 %v425, %v424
    %v427 = vld [vmem:[%s5] sm:$0x1]
    %v428 = vmul.f32 %v419, %v426
    %v429 = vsub.f32 %v427, %v428
    %430 = vst [vmem:[#allocation2] sm:$0xff] 0.0
    %431 = vst [vmem:[#allocation2 + $0x8] sm:$0xff] 0.0
    %432 = vst [vmem:[#allocation2 + $0x10] sm:$0xff] 0.0
    %433 = vst [vmem:[#allocation2 + $0x18] sm:$0xff] 0.0
    %434 = vst [vmem:[#allocation2 + $0x20] sm:$0xff] 0.0
    %435 = vst [vmem:[#allocation2 + $0x28] sm:$0xff] 0.0
    %436 = vst [vmem:[#allocation2 + $0x30] sm:$0xff] 0.0
    %437 = vst [vmem:[#allocation2 + $0x38] sm:$0xff] 0.0
    %438 = vst [vmem:[#allocation2 + $0x40] sm:$0xff] 0.0
    %439 = vst [vmem:[#allocation2 + $0x48] sm:$0xff] 0.0
    %440 = vst [vmem:[#allocation2 + $0x50] sm:$0xff] 0.0
    %441 = vst [vmem:[#allocation2 + $0x58] sm:$0xff] 0.0
    %442 = vst [vmem:[#allocation2 + $0x60] sm:$0xff] 0.0
    %443 = vst [vmem:[#allocation2 + $0x68] sm:$0xff] 0.0
    %444 = vst [vmem:[#allocation2 + $0x70] sm:$0xff] 0.0
    %445 = vst [vmem:[#allocation2 + $0x78] sm:$0xff] 0.0
    %v447 = vlaneseq
    %v448 = vshrl.u32 %v447, 7
    %v449 = vsub.s32 0, %v448
    %v450 = vrot.slane %v426, %v449
    %v452 = vmul.f32 %v284, %v450
    %v454 = vlaneseq
    %v455 = vshrl.u32 %v454, 7
    %v456 = vsub.s32 0, %v455
    %v457 = vrot.slane %v429, %v456
    %v459 = vadd.f32 %v452, %v457
    %v460 = vmax.f32 %v459, 0.0
    %v461 = vpack.c.bf16 %v460, %v460
    %v462 = vld [vmem:[%s6] sm:$0xf]
    %v463 = vld [vmem:[%s6 + $0x4] sm:$0xf]
    %v464 = vld [vmem:[%s6 + $0x8] sm:$0xf]
    %v465 = vld [vmem:[%s6 + $0xc] sm:$0xf]
    %v466 = vld [vmem:[%s6 + $0x10] sm:$0xf]
    %v467 = vld [vmem:[%s6 + $0x14] sm:$0xf]
    %v468 = vld [vmem:[%s6 + $0x18] sm:$0xf]
    %v469 = vld [vmem:[%s6 + $0x1c] sm:$0xf]
    %v470 = vld [vmem:[%s7] sm:$0x1]
    %v472 = vlaneseq
    %v473 = vshrl.u32 %v472, 7
    %v474 = vsub.s32 0, %v473
    %v475 = vrot.slane %v470, %v474
    %v485 = vunpack.c.l.b16 %v462
    %v486 = vunpack.c.l.b16 %v463
    %v487 = vunpack.c.l.b16 %v464
    %v488 = vunpack.c.l.b16 %v465
    %v489 = vunpack.c.l.b16 %v466
    %v490 = vunpack.c.l.b16 %v467
    %v491 = vunpack.c.l.b16 %v468
    %v492 = vunpack.c.l.b16 %v469
    %v493 = vpack.c.b16 %v486, %v485
    %v494 = vpack.c.b16 %v488, %v487
    %v495 = vpack.c.b16 %v490, %v489
    %v496 = vpack.c.b16 %v492, %v491
    %v502 = vsel %vm245, %v461, 0
    %504 = vmatprep.subr.bf16.mxu0 0
    %505 = vmatpush1.bf16.msra.mxu0 0
    %506 = vmatprep.subr.bf16.mxu0 0
    %507 = vmatpush1.bf16.msra.mxu0 0
    %508 = vmatprep.subr.bf16.mxu0 0
    %509 = vmatpush1.bf16.msra.mxu0 0
    %510 = vmatprep.subr.bf16.mxu0 0
    %511 = vmatpush1.bf16.msra.mxu0 0
    %512 = vmatprep.subr.bf16.mxu0 0
    %513 = vmatpush1.bf16.msra.mxu0 %v496
    %514 = vmatprep.subr.bf16.mxu0 0
    %515 = vmatpush1.bf16.msra.mxu0 %v495
    %516 = vmatprep.subr.bf16.mxu0 0
    %517 = vmatpush1.bf16.msra.mxu0 %v494
    %518 = vmatprep.subr.bf16.mxu0 0
    %519 = vmatpush1.bf16.msra.mxu0 %v493
    %520 = vmatprep.subr.bf16.mxu0 0
    %521 = vmatpush2.bf16.msra.mxu0 0
    %522 = vmatprep.subr.bf16.mxu0 0
    %523 = vmatpush2.bf16.msra.mxu0 0
    %524 = vmatprep.subr.bf16.mxu0 0
    %525 = vmatpush2.bf16.msra.mxu0 0
    %526 = vmatprep.subr.bf16.mxu0 0
    %527 = vmatpush2.bf16.msra.mxu0 0
    %528 = vmatprep.subr.bf16.mxu0 0
    %529 = vmatpush2.bf16.msra.mxu0 0
    %530 = vmatprep.subr.bf16.mxu0 0
    %531 = vmatpush2.bf16.msra.mxu0 0
    %532 = vmatprep.subr.bf16.mxu0 0
    %533 = vmatpush2.bf16.msra.mxu0 0
    %534 = vmatprep.subr.bf16.mxu0 0
    %535 = vmatpush2.bf16.msra.mxu0 0
    %536 = vmatprep.mubr.bf16.mxu0 0
    %537 = vmatmul.mubr.bf16.gmra.mxu0 %v502
    %v538 = vpop.f32.mrf.mxu0
    %v539 = vadd.f32 %v475, %v538
    %v540 = vpop.f32.mrf.mxu0
    %v541 = vpop.f32.mrf.mxu0
    %v542 = vpop.f32.mrf.mxu0
    %543 = vdwg.mxu0
    %v544 = vmul.f32 %v539, %v539
    %vm545 = vcmask 1043456
    %v546 = vsel %vm545, %v544, 0.0
    %547 = vadd.xlane.f32.xlu0 %v546
    %v548 = vpop.xlane.xlu0 %547
    %v549 = vmax.f32 %v548, 1e-24
    %v550 = vrsqrt.pop %v549
    %v551 = vmul.f32 %v539, %v550
    %552 = vst [vmem:[#allocation2] sm:$0xf] %v551
    %v553 = vmul.f32 %v381, %v450
    %v554 = vadd.f32 %v553, %v457
    %v555 = vmax.f32 %v554, 0.0
    %v556 = vpack.c.bf16 %v555, %v555
    %v557 = vld [vmem:[%s6] sm:$0xf]
    %v558 = vld [vmem:[%s6 + $0x4] sm:$0xf]
    %v559 = vld [vmem:[%s6 + $0x8] sm:$0xf]
    %v560 = vld [vmem:[%s6 + $0xc] sm:$0xf]
    %v561 = vld [vmem:[%s6 + $0x10] sm:$0xf]
    %v562 = vld [vmem:[%s6 + $0x14] sm:$0xf]
    %v563 = vld [vmem:[%s6 + $0x18] sm:$0xf]
    %v564 = vld [vmem:[%s6 + $0x1c] sm:$0xf]
    %v565 = vld [vmem:[%s7] sm:$0x1]
    %v567 = vlaneseq
    %v568 = vshrl.u32 %v567, 7
    %v569 = vsub.s32 0, %v568
    %v570 = vrot.slane %v565, %v569
    %v580 = vunpack.c.l.b16 %v557
    %v581 = vunpack.c.l.b16 %v558
    %v582 = vunpack.c.l.b16 %v559
    %v583 = vunpack.c.l.b16 %v560
    %v584 = vunpack.c.l.b16 %v561
    %v585 = vunpack.c.l.b16 %v562
    %v586 = vunpack.c.l.b16 %v563
    %v587 = vunpack.c.l.b16 %v564
    %v588 = vpack.c.b16 %v581, %v580
    %v589 = vpack.c.b16 %v583, %v582
    %v590 = vpack.c.b16 %v585, %v584
    %v591 = vpack.c.b16 %v587, %v586
    %v597 = vsel %vm245, %v556, 0
    %599 = vmatprep.subr.bf16.mxu0 0
    %600 = vmatpush1.bf16.msra.mxu0 0
    %601 = vmatprep.subr.bf16.mxu0 0
    %602 = vmatpush1.bf16.msra.mxu0 0
    %603 = vmatprep.subr.bf16.mxu0 0
    %604 = vmatpush1.bf16.msra.mxu0 0
    %605 = vmatprep.subr.bf16.mxu0 0
    %606 = vmatpush1.bf16.msra.mxu0 0
    %607 = vmatprep.subr.bf16.mxu0 0
    %608 = vmatpush1.bf16.msra.mxu0 %v591
    %609 = vmatprep.subr.bf16.mxu0 0
    %610 = vmatpush1.bf16.msra.mxu0 %v590
    %611 = vmatprep.subr.bf16.mxu0 0
    %612 = vmatpush1.bf16.msra.mxu0 %v589
    %613 = vmatprep.subr.bf16.mxu0 0
    %614 = vmatpush1.bf16.msra.mxu0 %v588
    %615 = vmatprep.subr.bf16.mxu0 0
    %616 = vmatpush2.bf16.msra.mxu0 0
    %617 = vmatprep.subr.bf16.mxu0 0
    %618 = vmatpush2.bf16.msra.mxu0 0
    %619 = vmatprep.subr.bf16.mxu0 0
    %620 = vmatpush2.bf16.msra.mxu0 0
    %621 = vmatprep.subr.bf16.mxu0 0
    %622 = vmatpush2.bf16.msra.mxu0 0
    %623 = vmatprep.subr.bf16.mxu0 0
    %624 = vmatpush2.bf16.msra.mxu0 0
    %625 = vmatprep.subr.bf16.mxu0 0
    %626 = vmatpush2.bf16.msra.mxu0 0
    %627 = vmatprep.subr.bf16.mxu0 0
    %628 = vmatpush2.bf16.msra.mxu0 0
    %629 = vmatprep.subr.bf16.mxu0 0
    %630 = vmatpush2.bf16.msra.mxu0 0
    %631 = vmatprep.mubr.bf16.mxu0 0
    %632 = vmatmul.mubr.bf16.gmra.mxu0 %v597
    %v633 = vpop.f32.mrf.mxu0
    %v634 = vadd.f32 %v570, %v633
    %v635 = vpop.f32.mrf.mxu0
    %v636 = vpop.f32.mrf.mxu0
    %v637 = vpop.f32.mrf.mxu0
    %638 = vdwg.mxu0
    %v639 = vmul.f32 %v634, %v634
    %v640 = vsel %vm545, %v639, 0.0
    %641 = vadd.xlane.f32.xlu0 %v640
    %v642 = vpop.xlane.xlu0 %641
    %v643 = vmax.f32 %v642, 1e-24
    %v644 = vrsqrt.pop %v643
    %v645 = vmul.f32 %v634, %v644
    %646 = vst [vmem:[#allocation2 + $0x4] sm:$0xf] %v645
    // Predicated region
    $region34: #{tpu_custom_call.1} parent=1 // pred_check
      _
    $region35: #{tpu_custom_call.1} parent=1 // pred_check_branch
      %648 = sbr.rel (0) target = $region37
    $region36: #{tpu_custom_call.1} parent=1 // pred_region
      %s650 = ssub.s32 2048, 2048
      %651 = vsyncadd [#allocation3], %s650
      %s652 = sshll.u32 [#allocation2], 4
      %s653 = int_to_ptr.vmem [resolvable:$true] %s652
      %658 = dma.vmem_to_hbm [thread:$0]  %s653, 2048, %s8, [#allocation3], 128, 128, 8
    $region37: #{tpu_custom_call.1} parent=1 // pred_fallthru
      _
    // Predicated region
    $region38: #{tpu_custom_call.1} parent=1 // pred_check
      _
    $region39: #{tpu_custom_call.1} parent=1 // pred_check_branch
      %660 = sbr.rel (0) target = $region41
    $region40: #{tpu_custom_call.1} parent=1 // pred_region
      %661 = dma.done [#allocation3], 2048
    $region41: #{tpu_custom_call.1} parent=1 // pred_fallthru
      _
    %662 = vsyncpa [#allocation3], 1

</llo_original>
